<compile_context>
chip_gen: v6e
topology: v6e:2x2x1
jax: 0.10.0
libtpu: 0.0.40
codegen_flags: <defaults>
</compile_context>

<pallas_src>
import functools
import math

import jax
import jax.numpy as jnp
from jax.experimental import pallas as pl
from jax.experimental.pallas import tpu as pltpu


_LANES = 512  # lane width of the flattened fallback slab (multiple of 128)


def _round_up(x, m):
    return ((x + m - 1) // m) * m


def _round_down(x, m):
    return (x // m) * m


def _cdiv(a, b):
    return (a + b - 1) // b


def _vmem_capacity_bytes():
    """Trace-time VMEM capacity; conservative (v7x) fallback if unavailable."""
    try:
        return int(pltpu.get_tpu_info().vmem_capacity_bytes)
    except Exception:
        return 64 * 1024 * 1024


def _mse_partial_kernel(ys_ref, yt_ref, out_ref, *, tile_rows, tiles_per_split,
                        total_rows, need_mask):
    # Grid: (split p = "parallel", row-tile i = "arbitrary" reduction axis).
    i = pl.program_id(1)

    @pl.when(i == 0)
    def _():
        out_ref[...] = jnp.zeros_like(out_ref)

    d = ys_ref[...].astype(jnp.float32) - yt_ref[...].astype(jnp.float32)
    sq = d * d

    if need_mask:
        # Ragged last tile (and fully-out-of-range dummy tiles of the second
        # split): zero out rows past the true row count.  Uses the UNCLAMPED
        # global row offset so dummy tiles contribute exactly 0.
        p = pl.program_id(0)
        row_start = (p * tiles_per_split + i) * tile_rows
        rows_left = total_rows - row_start
        row_ids = jax.lax.broadcasted_iota(jnp.int32, (tile_rows, 1), 0)
        sq = jnp.where(row_ids < rows_left, sq, 0.0)

    tr, w = sq.shape
    # VPU-only fold of the tile down to a vreg-shaped (8, W) partial that is
    # accumulated directly into the (resident) output block.  The single
    # cross-lane reduce happens once, in the wrapper.
    out_ref[...] += sq.reshape(tr // 8, 8, w).sum(axis=0)


class DistillKLOne:
    """JAX/Pallas port of the PyTorch DistillKLOne module (forward = MSE)."""

    def __init__(self, T):
        self.T = T  # unused by forward (matches the reference module)

    def __call__(self, y_s, y_t):
        assert y_s.shape == y_t.shape
        shape = y_s.shape
        n = math.prod(shape) if shape else 1
        itemsize = max(y_s.dtype.itemsize, y_t.dtype.itemsize)

        # ---- generation-aware sizing -------------------------------------
        vmem = _vmem_capacity_bytes()
        if vmem <= 96 * 1024 * 1024:
            # v7x: 64 MiB VMEM per TensorCore, 2 TCs/chip.
            per_buffer_bytes = 4 * 1024 * 1024
            vmem_limit = 48 * 1024 * 1024
            max_splits = 2
        else:
            # v5e / v6e: 128 MiB VMEM, single TensorCore.
            per_buffer_bytes = 8 * 1024 * 1024
            vmem_limit = 64 * 1024 * 1024
            max_splits = 1

        # ---- choose layout without extra HBM passes ----------------------
        use_native = (
            len(shape) >= 2
            and shape[-1] >= 128
            and math.prod(shape[:-1]) >= 8
            and 8 * shape[-1] * itemsize <= per_buffer_bytes
        )

        if use_native:
            # Keep the natural (rows, classes) layout: no pad, no copy.  A
            # non-128-multiple C wastes at most one lane group per row, far
            # cheaper than an extra read+write HBM pass for padding.
            C = shape[-1]
            R = math.prod(shape[:-1])
            ys2 = y_s.reshape(R, C)
            yt2 = y_t.reshape(R, C)
            bytes_per_row = C * itemsize
            max_tile_rows = max(8, _round_down(per_buffer_bytes // bytes_per_row, 8))
            tile_rows = min(max_tile_rows, _round_down(R, 8))
            W = C
            total_rows = R
        else:
            # Fallback: flatten to a lane-dense (rows, 512) slab, padding only
            # the tail up to a multiple of 8 rows (< 4096 zero elements).
            rows = _cdiv(n, _LANES)
            padded_rows = _round_up(rows, 8)
            padded_n = padded_rows * _LANES

            def _prep(x):
                x = x.reshape(-1)
                if padded_n != n:
                    x = jnp.pad(x, (0, padded_n - n))
                return x.reshape(padded_rows, _LANES)

            ys2 = _prep(y_s)
            yt2 = _prep(y_t)
            bytes_per_row = _LANES * itemsize
            max_tile_rows = max(8, _round_down(per_buffer_bytes // bytes_per_row, 8))
            tile_rows = min(max_tile_rows, padded_rows)
            W = _LANES
            total_rows = padded_rows

        num_row_blocks = _cdiv(total_rows, tile_rows)
        num_splits = max_splits if num_row_blocks >= 2 else 1
        tiles_per_split = _cdiv(num_row_blocks, num_splits)

        covered_rows = num_splits * tiles_per_split * tile_rows
        need_mask = covered_rows != total_rows
        need_clamp = num_splits * tiles_per_split > num_row_blocks

        if need_clamp:
            def in_index(p, i):
                return (jnp.minimum(p * tiles_per_split + i, num_row_blocks - 1), 0)
        else:
            def in_index(p, i):
                return (p * tiles_per_split + i, 0)

        kernel = functools.partial(
            _mse_partial_kernel,
            tile_rows=tile_rows,
            tiles_per_split=tiles_per_split,
            total_rows=total_rows,
            need_mask=need_mask,
        )

        bytes_accessed = (
            n * (y_s.dtype.itemsize + y_t.dtype.itemsize)
            + num_splits * 8 * W * 4
        )
        cost = pl.CostEstimate(flops=3 * n, transcendentals=0,
                               bytes_accessed=bytes_accessed)

        partials = pl.pallas_call(
            kernel,
            out_shape=jax.ShapeDtypeStruct((num_splits, 8, W), jnp.float32),
            grid_spec=pltpu.PrefetchScalarGridSpec(
                num_scalar_prefetch=0,
                grid=(num_splits, tiles_per_split),
                in_specs=[
                    pl.BlockSpec((tile_rows, W), in_index),
                    pl.BlockSpec((tile_rows, W), in_index),
                ],
                out_specs=pl.BlockSpec((None, 8, W), lambda p, i: (p, 0, 0)),
            ),
            compiler_params=pltpu.CompilerParams(
                dimension_semantics=("parallel", "arbitrary"),
                vmem_limit_bytes=vmem_limit,
            ),
            cost_estimate=cost,
        )(ys2, yt2)

        loss = jnp.sum(partials) * (1.0 / float(n))
        out_dtype = jnp.promote_types(y_s.dtype, y_t.dtype)
        if jnp.issubdtype(out_dtype, jnp.floating):
            loss = loss.astype(out_dtype)
        return loss


if __name__ == "__main__":
    key = jax.random.PRNGKey(0)
    model = DistillKLOne(T=4.0)
    k1, k2, k3, k4, k5, k6 = jax.random.split(key, 6)

    # Case 1: lane-aligned logits [batch, num_classes] -> native 2D path.
    y_s = jax.random.normal(k1, (16, 128), dtype=jnp.float32)
    y_t = jax.random.normal(k2, (16, 128), dtype=jnp.float32)
    loss = jax.block_until_ready(model(y_s, y_t))
    ref = jnp.mean((y_s - y_t) ** 2)
    assert jnp.allclose(loss, ref, rtol=1e-5, atol=1e-6), (loss, ref)

    # Case 2: small / non-128-aligned class count -> flattened fallback path.
    y_s2 = jax.random.normal(k3, (10, 100), dtype=jnp.float32)
    y_t2 = jax.random.normal(k4, (10, 100), dtype=jnp.float32)
    loss2 = jax.block_until_ready(model(y_s2, y_t2))
    ref2 = jnp.mean((y_s2 - y_t2) ** 2)
    assert jnp.allclose(loss2, ref2, rtol=1e-5, atol=1e-6), (loss2, ref2)

    # Case 3: unaligned rows + non-128-multiple classes -> native path with
    # ragged-tile masking (no pad copy).
    y_s3 = jax.random.normal(k5, (50, 200), dtype=jnp.float32)
    y_t3 = jax.random.normal(k6, (50, 200), dtype=jnp.float32)
    loss3 = jax.block_until_ready(model(y_s3, y_t3))
    ref3 = jnp.mean((y_s3 - y_t3) ** 2)
    assert jnp.allclose(loss3, ref3, rtol=1e-5, atol=1e-6), (loss3, ref3)

    print("KERNEL_OK")
</pallas_src>

<mosaic_0001>
module attributes {stable_mosaic.version = 11 : i64} {
  func.func @_mse_partial_kernel(%arg0: i32, %arg1: i32, %arg2: memref<16x128xf32, #tpu.memory_space<vmem>>, %arg3: memref<16x128xf32, #tpu.memory_space<vmem>>, %arg4: memref<1x8x128xf32, #tpu.memory_space<vmem>>) attributes {dimension_semantics = [#tpu.dimension_semantics<parallel>, #tpu.dimension_semantics<arbitrary>], iteration_bounds = array<i64: 1, 1>, scalar_prefetch = 0 : i64, scratch_operands = 0 : i64, tpu.core_type = #tpu.core_type<tc>, window_params = [{transform_indices = @transform_0, window_bounds = array<i64: 16, 128>}, {transform_indices = @transform_1, window_bounds = array<i64: 16, 128>}, {transform_indices = @transform_2, window_bounds = array<i64: 1, 8, 128>}]} {
    %c0_i32 = arith.constant 0 : i32
    %0 = arith.cmpi eq, %arg1, %c0_i32 : i32
    %1 = arith.extui %0 : i1 to i32
    %c0_i32_0 = arith.constant 0 : i32
    %2 = arith.cmpi ne, %1, %c0_i32_0 : i32
    scf.if %2 {
      %cst_10 = arith.constant 0.000000e+00 : f32
      %15 = vector.broadcast %cst_10 : f32 to vector<8x128xf32>
      %c0_11 = arith.constant 0 : index
      %c0_12 = arith.constant 0 : index
      %c0_13 = arith.constant 0 : index
      %16 = vector.load %arg4[%c0_11, %c0_12, %c0_13] : memref<1x8x128xf32, #tpu.memory_space<vmem>>, vector<1x8x128xf32>
      %17 = vector.shape_cast %16 : vector<1x8x128xf32> to vector<8x128xf32>
      %18 = vector.shape_cast %15 : vector<8x128xf32> to vector<1x8x128xf32>
      tpu.vector_store %arg4[%c0_11, %c0_12, %c0_13], %18 {strides = array<i32>} : memref<1x8x128xf32, #tpu.memory_space<vmem>>, vector<1x8x128xf32>,
    } else {
    }
    %c0 = arith.constant 0 : index
    %c0_1 = arith.constant 0 : index
    %3 = vector.load %arg2[%c0, %c0_1] : memref<16x128xf32, #tpu.memory_space<vmem>>, vector<16x128xf32>
    %c0_2 = arith.constant 0 : index
    %c0_3 = arith.constant 0 : index
    %4 = vector.load %arg3[%c0_2, %c0_3] : memref<16x128xf32, #tpu.memory_space<vmem>>, vector<16x128xf32>
    %5 = arith.subf %3, %4 : vector<16x128xf32>
    %6 = arith.mulf %5, %5 : vector<16x128xf32>
    %c0_4 = arith.constant 0 : index
    %c0_5 = arith.constant 0 : index
    %c0_6 = arith.constant 0 : index
    %7 = vector.load %arg4[%c0_4, %c0_5, %c0_6] : memref<1x8x128xf32, #tpu.memory_space<vmem>>, vector<1x8x128xf32>
    %8 = vector.shape_cast %7 : vector<1x8x128xf32> to vector<8x128xf32>
    %9 = vector.shape_cast %6 : vector<16x128xf32> to vector<2x8x128xf32>
    %cst = arith.constant dense<0.000000e+00> : vector<8x128xf32>
    %10 = vector.multi_reduction <add>, %9, %cst [0] : vector<2x8x128xf32> to vector<8x128xf32>
    %11 = arith.addf %8, %10 : vector<8x128xf32>
    %c0_7 = arith.constant 0 : index
    %c0_8 = arith.constant 0 : index
    %c0_9 = arith.constant 0 : index
    %12 = vector.load %arg4[%c0_7, %c0_8, %c0_9] : memref<1x8x128xf32, #tpu.memory_space<vmem>>, vector<1x8x128xf32>
    %13 = vector.shape_cast %12 : vector<1x8x128xf32> to vector<8x128xf32>
    %14 = vector.shape_cast %11 : vector<8x128xf32> to vector<1x8x128xf32>
    tpu.vector_store %arg4[%c0_7, %c0_8, %c0_9], %14 {strides = array<i32>} : memref<1x8x128xf32, #tpu.memory_space<vmem>>, vector<1x8x128xf32>,
    return
  }
  func.func @transform_0(%arg0: i32, %arg1: i32) -> (i32, i32) {
    %c1_i32 = arith.constant 1 : i32
    %0 = arith.muli %arg0, %c1_i32 : i32
    %1 = arith.addi %0, %arg1 : i32
    %c0_i32 = arith.constant 0 : i32
    %c0_i32_0 = arith.constant 0 : i32
    return %1, %c0_i32 : i32, i32
  }
  func.func @transform_1(%arg0: i32, %arg1: i32) -> (i32, i32) {
    %c1_i32 = arith.constant 1 : i32
    %0 = arith.muli %arg0, %c1_i32 : i32
    %1 = arith.addi %0, %arg1 : i32
    %c0_i32 = arith.constant 0 : i32
    %c0_i32_0 = arith.constant 0 : i32
    return %1, %c0_i32 : i32, i32
  }
  func.func @transform_2(%arg0: i32, %arg1: i32) -> (i32, i32, i32) {
    %c0_i32 = arith.constant 0 : i32
    %c0_i32_0 = arith.constant 0 : i32
    %c0_i32_1 = arith.constant 0 : i32
    return %arg0, %c0_i32, %c0_i32_0 : i32, i32, i32
  }
}

</mosaic_0001>

<llo_original>
// kernel: tpu_custom_call.1
$region0: #{tpu_custom_call.1}
  #allocation0 [shape = 'u32[]', space=smem, size = 0x4, offset = 0x4, fixed_abs, tag = 'smem constant byte address 0x4 - core index']
  #allocation1 [shape = 'u32[144,128]{1,0:T(1,128)}', space=vmem, size = 0x12000, scoped, tag = 'internal scratch']
  %s0 = inlined_call_operand.hbm [shape: f32[16,128], index: 0, kind: input, shape index: {}]
  %s1 = inlined_call_operand.hbm [shape: f32[16,128], index: 1, kind: input, shape index: {}]
  %s2 = inlined_call_operand.hbm [shape: f32[1,8,128], index: 2, kind: output, shape index: {}]
  %s3 = sld [smem:[#allocation0]]
  $region30: #{tpu_custom_call.1} parent=0
    _
  %s5 = ssub.s32 1, %s3
  %s6 = scalar_select 0, %s5, %s3
  $region1: #{tpu_custom_call.1} parent=0
    #allocation2 [shape = 'u8[8192]{0}', space=vmem, size = 0x2000, scoped, tag = 'input window, operand 0, single buffered']
    #allocation3 [shape = 's32[1]{0}', space=sflag, size = 0x4, scoped, tag = 'scoped memory for tpu_custom_call.1']
    #allocation4 [shape = 's32[1]{0}', space=sflag, size = 0x4, scoped, tag = 'scoped memory for tpu_custom_call.1']
    #allocation5 [shape = 'u8[8192]{0}', space=vmem, size = 0x2000, scoped, tag = 'input window, operand 1, single buffered']
    #allocation6 [shape = 's32[1]{0}', space=sflag, size = 0x4, scoped, tag = 'scoped memory for tpu_custom_call.1']
    #allocation7 [shape = 'u8[4096]{0}', space=vmem, size = 0x1000, scoped, tag = 'output window, operand 0, single buffered']
    %7 = vsyncpa [#allocation3], 0
    %8 = vsyncpa [#allocation6], 0
    %9 = vsyncpa [#allocation4], 0
    // Predicated region
    $region2: #{tpu_custom_call.1} parent=1 // pred_check
      _
    $region3: #{tpu_custom_call.1} parent=1 // pred_check_branch
      %11 = sbr.rel (0) target = $region5
    $region4: #{tpu_custom_call.1} parent=1 // pred_region
      %s12 = sadd.s32 0, 0
      %s13 = smul.u32 2, %s12
      %s15 = ssub.s32 256, 256
      %16 = vsyncadd [#allocation3], %s15
      %s17 = smul.addr %s13, 128
      %s18 = scalar_lea.hbm %s0, %s17
      %s19 = sshll.u32 [#allocation2], 4
      %s20 = int_to_ptr.vmem [resolvable:$true] %s19
      %25 = dma.hbm_to_vmem [thread:$0]  %s18, 256, %s20, [#allocation3], 128, 128, 8
    $region5: #{tpu_custom_call.1} parent=1 // pred_fallthru
      _
    // Predicated region
    $region6: #{tpu_custom_call.1} parent=1 // pred_check
      _
    $region7: #{tpu_custom_call.1} parent=1 // pred_check_branch
      %27 = sbr.rel (0) target = $region9
    $region8: #{tpu_custom_call.1} parent=1 // pred_region
      %s28 = sadd.s32 0, 0
      %s29 = smul.u32 2, %s28
      %s31 = ssub.s32 256, 256
      %32 = vsyncadd [#allocation6], %s31
      %s33 = smul.addr %s29, 128
      %s34 = scalar_lea.hbm %s1, %s33
      %s35 = sshll.u32 [#allocation5], 4
      %s36 = int_to_ptr.vmem [resolvable:$true] %s35
      %41 = dma.hbm_to_vmem [thread:$0]  %s34, 256, %s36, [#allocation6], 128, 128, 8
    $region9: #{tpu_custom_call.1} parent=1 // pred_fallthru
      _
    // Predicated region
    $region10: #{tpu_custom_call.1} parent=1 // pred_check
      _
    $region11: #{tpu_custom_call.1} parent=1 // pred_check_branch
      %43 = sbr.rel (0) target = $region13
    $region12: #{tpu_custom_call.1} parent=1 // pred_region
      %44 = dma.done [#allocation3], 256
    $region13: #{tpu_custom_call.1} parent=1 // pred_fallthru
      _
    // Predicated region
    $region14: #{tpu_custom_call.1} parent=1 // pred_check
      _
    $region15: #{tpu_custom_call.1} parent=1 // pred_check_branch
      %46 = sbr.rel (0) target = $region17
    $region16: #{tpu_custom_call.1} parent=1 // pred_region
      %47 = dma.done [#allocation6], 256
    $region17: #{tpu_custom_call.1} parent=1 // pred_fallthru
      _
    %s48 = sadd.s32 0, 0
    %s49 = smul.u32 2, %s48
    %s50 = sadd.s32 0, 0
    %s51 = smul.u32 2, %s50
    %p52 = scmp.eq.s32.totalorder 0, 0
    // Predicated region
    $region18: #{tpu_custom_call.1} parent=1 // pred_check
      %p53 = pneg %p52
    $region19: #{tpu_custom_call.1} parent=1 // pred_check_branch
      %55 = sbr.rel (%p53) target = $region21
    $region20: #{tpu_custom_call.1} parent=1 // pred_region
      %56 = vst [vmem:[#allocation7] sm:$0xff] 0.0
    $region21: #{tpu_custom_call.1} parent=1 // pred_fallthru
      _
    %v57 = vld [vmem:[#allocation2] sm:$0xff]
    %v58 = vld [vmem:[#allocation2 + $0x8] sm:$0xff]
    %v59 = vld [vmem:[#allocation5] sm:$0xff]
    %v60 = vld [vmem:[#allocation5 + $0x8] sm:$0xff]
    %v61 = vsub.f32 %v57, %v59
    %v62 = vsub.f32 %v58, %v60
    %v63 = vmul.f32 %v61, %v61
    %v64 = vmul.f32 %v62, %v62
    %v65 = vld [vmem:[#allocation7] sm:$0xff]
    %v66 = vadd.f32 %v63, %v64
    %v67 = vadd.f32 %v65, %v66
    %68 = vst [vmem:[#allocation7] sm:$0xff] %v67
    // Predicated region
    $region22: #{tpu_custom_call.1} parent=1 // pred_check
      _
    $region23: #{tpu_custom_call.1} parent=1 // pred_check_branch
      %70 = sbr.rel (0) target = $region25
    $region24: #{tpu_custom_call.1} parent=1 // pred_region
      %s72 = ssub.s32 128, 128
      %73 = vsyncadd [#allocation4], %s72
      %s75 = sshll.u32 [#allocation7], 4
      %s76 = int_to_ptr.vmem [resolvable:$true] %s75
      %78 = dma.vmem_to_hbm [thread:$0]  %s76, 128, %s2, [#allocation4]
    $region25: #{tpu_custom_call.1} parent=1 // pred_fallthru
      _
    // Predicated region
    $region26: #{tpu_custom_call.1} parent=1 // pred_check
      _
    $region27: #{tpu_custom_call.1} parent=1 // pred_check_branch
      %80 = sbr.rel (0) target = $region29
    $region28: #{tpu_custom_call.1} parent=1 // pred_region
      %81 = dma.done [#allocation4], 128
    $region29: #{tpu_custom_call.1} parent=1 // pred_fallthru
      _
    %82 = vsyncpa [#allocation3], 1
    %83 = vsyncpa [#allocation6], 1
    %84 = vsyncpa [#allocation4], 1

</llo_original>
